<compile_context>
chip_gen: v6e
topology: v6e:2x2x1
jax: 0.10.0
libtpu: 0.0.40
codegen_flags: <defaults>
</compile_context>

<pallas_src>
import jax
import jax.numpy as jnp
from jax.experimental import pallas as pl
from jax.experimental.pallas import tpu as pltpu


# --------------------------------------------------------------------------- #
# Kernel
# --------------------------------------------------------------------------- #
def _mlp_kernel(x_ref, wgu_ref, wd_ref, o_ref, acc_ref):
    # x_ref  : (tm, H)      token tile
    # wgu_ref: (2, H, ti)   stacked [gate; up] weights, [in, out] layout
    # wd_ref : (ti, H)      down_proj weights, [in, out] layout
    # o_ref  : (tm, H)      output tile (resident across the j axis)
    # acc_ref: (tm, H)      f32 accumulator scratch
    j = pl.program_id(1)

    @pl.when(j == 0)
    def _():
        acc_ref[...] = jnp.zeros_like(acc_ref)

    x = x_ref[...]
    # Plain NN dots: K (=H) is the sublane axis of the RHS tile -> no relayout.
    g = jnp.dot(x, wgu_ref[0], preferred_element_type=jnp.float32)   # (tm, ti)
    u = jnp.dot(x, wgu_ref[1], preferred_element_type=jnp.float32)   # (tm, ti)
    h = (g * jax.nn.sigmoid(g)) * u                                   # SiLU(g)*u, f32

    # down_proj partial sum for this I tile: (tm, ti) @ (ti, H) -> (tm, H)
    acc_ref[...] += jnp.dot(h.astype(wd_ref.dtype), wd_ref[...],
                            preferred_element_type=jnp.float32)

    @pl.when(j == pl.num_programs(1) - 1)
    def _():
        o_ref[...] = acc_ref[...].astype(o_ref.dtype)


# --------------------------------------------------------------------------- #
# Tile / budget selection helpers
# --------------------------------------------------------------------------- #
def _round_up(x, m):
    return ((x + m - 1) // m) * m


def _tpu_generation():
    try:
        kind = jax.devices()[0].device_kind.lower()
    except Exception:
        return ""
    for g in ("v7", "v6", "v5", "v4"):
        if g in kind:
            return g
    return ""


def _vmem_capacity_bytes(gen):
    try:
        info = pltpu.get_tpu_info()
        cap = getattr(info, "vmem_capacity_bytes", None)
        if cap:
            return int(cap)
    except Exception:
        pass
    return (64 << 20) if gen == "v7" else (128 << 20)


def _aligned_divisors(I, granule=128):
    """Divisors of I that are lane-aligned (multiples of `granule`), plus I."""
    divs = {d for d in range(granule, I + 1, granule) if I % d == 0}
    divs.add(I)
    return sorted(divs)


def _pick_token_tile(M, target, granule=8):
    """Pick (tm_eff, m_pad).  Prefers tiles that divide M exactly (no pad/slice
    HBM round trip), searching multiples of 256 / 128 / `granule`, and keeps
    >= 2 token blocks when M is large enough (megacore 'parallel' axis)."""
    target = max(granule, target)
    if M >= 2 * 256:
        target = min(target, _round_up(pl.cdiv(M, 2), 256))
    if M <= target:
        return M, M                       # one block == full dim (always legal)
    lo = max(granule, (min(target, M) // 4 // granule) * granule)
    for g in (256, 128, granule):
        t = (min(target, M) // g) * g
        while t >= max(g, lo):
            if M % t == 0:
                return t, M
            t -= g
    tm = max(granule, (target // granule) * granule)
    return tm, _round_up(M, tm)           # fallback: pad the ragged tail


# --------------------------------------------------------------------------- #
# Public API
# --------------------------------------------------------------------------- #
def prepare_mlp_weights(w_gate, w_up, w_down, compute_dtype=None):
    """Re-layout PyTorch nn.Linear weights for the kernel.  Do this ONCE at
    model-load time:  gate/up [I, H] -> stacked [2, H, I];  down [H, I] -> [I, H]."""
    w_gu = jnp.stack([w_gate.T, w_up.T], axis=0)   # [2, H, I]
    w_d = w_down.T                                  # [I, H]
    if compute_dtype is not None:
        w_gu = w_gu.astype(compute_dtype)
        w_d = w_d.astype(compute_dtype)
    return w_gu, w_d


def mlp_pallas(x, w_gu, w_d, *, tm=None, ti=None, compute_dtype=None,
               interpret=False):
    """SwiGLU MLP forward.
       x    : [..., H] activations.
       w_gu : [2, H, I] stacked (gate, up) weights (see prepare_mlp_weights).
       w_d  : [I, H]    down_proj weights.
       Returns an array shaped like x (same dtype)."""
    orig_shape = x.shape
    H = orig_shape[-1]
    I = w_gu.shape[-1]
    M = 1
    for d in orig_shape[:-1]:
        M *= d
    out_dtype = x.dtype

    x2d = x.reshape(M, H)
    if compute_dtype is not None and x2d.dtype != jnp.dtype(compute_dtype):
        # e.g. on v5e run the matmuls in bf16; accumulation stays f32.
        x2d = x2d.astype(compute_dtype)
        w_gu = w_gu.astype(compute_dtype)
        w_d = w_d.astype(compute_dtype)

    act_bytes = jnp.dtype(x2d.dtype).itemsize
    w_bytes = jnp.dtype(w_gu.dtype).itemsize
    granule = 16 if act_bytes == 2 else (32 if act_bytes == 1 else 8)

    # ---- generation-aware defaults and VMEM budget --------------------------
    gen = _tpu_generation()
    if tm is None:
        tm = {"v5": 256, "v6": 1024, "v7": 512}.get(gen, 512)
    if ti is None:
        ti = 512
    vmem_budget = max(_vmem_capacity_bytes(gen) - (8 << 20), 32 << 20)

    # ---- tile selection ------------------------------------------------------
    tm_eff, m_pad = _pick_token_tile(M, tm, granule=granule)
    ti_divs = _aligned_divisors(I)
    cands = [d for d in ti_divs if d <= ti]
    ti_eff = max(cands) if cands else min(ti_divs)

    def vmem_need(tm_, ti_):
        # double-buffered x/out tiles + gate/up/down weight tiles,
        # plus the f32 accumulator and the f32 g/u/h temporaries.
        tiles = 2 * tm_ * H * act_bytes + 3 * H * ti_ * w_bytes
        return 2 * tiles + tm_ * H * 4 + 3 * tm_ * ti_ * 4

    # auto-shrink so the working set fits this generation's VMEM (v7x: 64 MiB)
    while vmem_need(tm_eff, ti_eff) > vmem_budget:
        smaller_ti = [d for d in ti_divs if d < ti_eff]
        if smaller_ti:
            ti_eff = max(smaller_ti)
        elif tm_eff > granule:
            tm_eff, m_pad = _pick_token_tile(M, max(granule, tm_eff // 2),
                                             granule=granule)
        else:
            break

    if m_pad != M:
        # TODO(synk): handle the ragged tail with a second small pallas_call
        # instead of padding, to avoid the extra HBM round trip.
        x2d = jnp.pad(x2d, ((0, m_pad - M), (0, 0)))

    grid = (m_pad // tm_eff, I // ti_eff)
    n_token_blocks = grid[0]

    vmem_limit = int(min(max(vmem_need(tm_eff, ti_eff) + (4 << 20), 32 << 20),
                         vmem_budget))

    cost = pl.CostEstimate(
        flops=6 * M * H * I,                    # 3 matmuls, 2*M*H*I each
        transcendentals=M * I,                  # sigmoid
        # activations once; weights re-streamed once per token tile.
        bytes_accessed=act_bytes * 2 * M * H + w_bytes * n_token_blocks * 3 * H * I,
    )

    out2d = pl.pallas_call(
        _mlp_kernel,
        out_shape=jax.ShapeDtypeStruct((m_pad, H), out_dtype),
        grid_spec=pltpu.PrefetchScalarGridSpec(
            num_scalar_prefetch=0,
            grid=grid,
            in_specs=[
                pl.BlockSpec((tm_eff, H), lambda i, j: (i, 0)),        # x tile
                pl.BlockSpec((2, H, ti_eff), lambda i, j: (0, 0, j)),  # gate+up
                pl.BlockSpec((ti_eff, H), lambda i, j: (j, 0)),        # down
            ],
            out_specs=pl.BlockSpec((tm_eff, H), lambda i, j: (i, 0)),
            scratch_shapes=[pltpu.VMEM((tm_eff, H), jnp.float32)],
        ),
        compiler_params=pltpu.CompilerParams(
            dimension_semantics=("parallel", "arbitrary"),
            vmem_limit_bytes=vmem_limit,
        ),
        cost_estimate=cost,
        interpret=interpret,
    )(x2d, w_gu, w_d)

    if m_pad != M:
        out2d = out2d[:M]
    return out2d.reshape(orig_shape)


def mlp_pallas_from_torch_layout(x, w_gate, w_up, w_down, **kw):
    """Convenience wrapper taking PyTorch nn.Linear layout weights."""
    w_gu, w_d = prepare_mlp_weights(w_gate, w_up, w_down,
                                    compute_dtype=kw.get("compute_dtype"))
    return mlp_pallas(x, w_gu, w_d, **kw)


# --------------------------------------------------------------------------- #
# Reference + tests
# --------------------------------------------------------------------------- #
def mlp_reference(x, w_gate, w_up, w_down):
    """Pure-JAX reference matching the PyTorch forward exactly."""
    g = jnp.einsum("bsh,ih->bsi", x, w_gate)
    u = jnp.einsum("bsh,ih->bsi", x, w_up)
    h = jax.nn.silu(g) * u
    return jnp.einsum("bsi,hi->bsh", h, w_down)


def _make_weights(key, H, I, dtype):
    kg, ku, kd = jax.random.split(key, 3)
    sh, si = 1.0 / (H ** 0.5), 1.0 / (I ** 0.5)
    w_gate = jax.random.uniform(kg, (I, H), jnp.float32, -sh, sh).astype(dtype)
    w_up = jax.random.uniform(ku, (I, H), jnp.float32, -sh, sh).astype(dtype)
    w_down = jax.random.uniform(kd, (H, I), jnp.float32, -si, si).astype(dtype)
    return w_gate, w_up, w_down


if __name__ == "__main__":
    key = jax.random.PRNGKey(0)

    # ---- Test 1: small config (hidden=32, intermediate=64), single grid step.
    B, S, H, I = 2, 8, 32, 64
    k1, k2, key = jax.random.split(key, 3)
    x = jax.random.normal(k1, (B, S, H), dtype=jnp.float32)
    w_gate, w_up, w_down = _make_weights(k2, H, I, jnp.float32)
    w_gu, w_d = prepare_mlp_weights(w_gate, w_up, w_down)

    out = jax.block_until_ready(mlp_pallas(x, w_gu, w_d))
    ref = mlp_reference(x, w_gate, w_up, w_down)
    assert out.shape == (B, S, H)
    assert jnp.allclose(out, ref, atol=1e-5, rtol=1e-5), "mismatch (small config)"

    # ---- Test 2: exercises the tiled intermediate-dim accumulator
    #      (I=1024 -> multiple reduction steps) with a larger token count.
    B2, S2, H2, I2 = 2, 192, 256, 1024
    k3, k4, key = jax.random.split(key, 3)
    x2 = jax.random.normal(k3, (B2, S2, H2), dtype=jnp.float32)
    wg2, wu2, wd2 = _make_weights(k4, H2, I2, jnp.float32)
    wgu2, wdn2 = prepare_mlp_weights(wg2, wu2, wd2)

    out2 = jax.block_until_ready(mlp_pallas(x2, wgu2, wdn2))
    ref2 = mlp_reference(x2, wg2, wu2, wd2)
    assert out2.shape == (B2, S2, H2)
    assert jnp.allclose(out2, ref2, atol=1e-4, rtol=1e-4), "mismatch (tiled config)"

    # ---- Test 3: bf16 activations/weights (MXU fast path), f32 accumulation.
    k5, k6 = jax.random.split(key, 2)
    x3 = jax.random.normal(k5, (B2, S2, H2), dtype=jnp.float32).astype(jnp.bfloat16)
    wg3, wu3, wd3 = _make_weights(k6, H2, I2, jnp.bfloat16)
    wgu3, wdn3 = prepare_mlp_weights(wg3, wu3, wd3)

    out3 = jax.block_until_ready(mlp_pallas(x3, wgu3, wdn3))
    ref3 = mlp_reference(x3.astype(jnp.float32), wg3.astype(jnp.float32),
                         wu3.astype(jnp.float32), wd3.astype(jnp.float32))
    assert out3.dtype == jnp.bfloat16 and out3.shape == (B2, S2, H2)
    assert jnp.allclose(out3.astype(jnp.float32), ref3, atol=2e-2, rtol=2e-2), \
        "mismatch (bf16 config)"

    print("KERNEL_OK")
</pallas_src>

<mosaic_0001>
module attributes {stable_mosaic.version = 11 : i64} {
  func.func @_mlp_kernel(%arg0: i32, %arg1: i32, %arg2: memref<16x32xf32, #tpu.memory_space<vmem>>, %arg3: memref<2x32x64xf32, #tpu.memory_space<vmem>>, %arg4: memref<64x32xf32, #tpu.memory_space<vmem>>, %arg5: memref<16x32xf32, #tpu.memory_space<vmem>>, %arg6: memref<16x32xf32, #tpu.memory_space<vmem>>) attributes {dimension_semantics = [#tpu.dimension_semantics<parallel>, #tpu.dimension_semantics<arbitrary>], iteration_bounds = array<i64: 1, 1>, scalar_prefetch = 0 : i64, scratch_operands = 1 : i64, tpu.core_type = #tpu.core_type<tc>, window_params = [{transform_indices = @transform_0, window_bounds = array<i64: 16, 32>}, {transform_indices = @transform_1, window_bounds = array<i64: 2, 32, 64>}, {transform_indices = @transform_2, window_bounds = array<i64: 64, 32>}, {transform_indices = @transform_3, window_bounds = array<i64: 16, 32>}]} {
    %c0_i32 = arith.constant 0 : i32
    %0 = arith.cmpi eq, %arg1, %c0_i32 : i32
    %1 = arith.extui %0 : i1 to i32
    %c0_i32_0 = arith.constant 0 : i32
    %2 = arith.cmpi ne, %1, %c0_i32_0 : i32
    scf.if %2 {
      %cst_18 = arith.constant 0.000000e+00 : f32
      %25 = vector.broadcast %cst_18 : f32 to vector<16x32xf32>
      %c0_19 = arith.constant 0 : index
      %c0_20 = arith.constant 0 : index
      %26 = vector.load %arg6[%c0_19, %c0_20] : memref<16x32xf32, #tpu.memory_space<vmem>>, vector<16x32xf32>
      tpu.vector_store %arg6[%c0_19, %c0_20], %25 {strides = array<i32>} : memref<16x32xf32, #tpu.memory_space<vmem>>, vector<16x32xf32>,
    } else {
    }
    %c0 = arith.constant 0 : index
    %c0_1 = arith.constant 0 : index
    %3 = vector.load %arg2[%c0, %c0_1] : memref<16x32xf32, #tpu.memory_space<vmem>>, vector<16x32xf32>
    %c0_2 = arith.constant 0 : index
    %c0_3 = arith.constant 0 : index
    %c0_4 = arith.constant 0 : index
    %4 = vector.load %arg3[%c0_2, %c0_3, %c0_4] : memref<2x32x64xf32, #tpu.memory_space<vmem>>, vector<1x32x64xf32>
    %5 = vector.shape_cast %4 : vector<1x32x64xf32> to vector<32x64xf32>
    %cst = arith.constant dense<0.000000e+00> : vector<16x64xf32>
    %6 = tpu.matmul %3, %5, %cst {dimension_numbers = #tpu.dot_dimension_numbers<[1], [0], [0], [1], [0, 0, 1, 1], [], []>} : vector<16x32xf32>, vector<32x64xf32>, vector<16x64xf32> -> vector<16x64xf32>
    %c1 = arith.constant 1 : index
    %c0_5 = arith.constant 0 : index
    %c0_6 = arith.constant 0 : index
    %7 = vector.load %arg3[%c1, %c0_5, %c0_6] : memref<2x32x64xf32, #tpu.memory_space<vmem>>, vector<1x32x64xf32>
    %8 = vector.shape_cast %7 : vector<1x32x64xf32> to vector<32x64xf32>
    %cst_7 = arith.constant dense<0.000000e+00> : vector<16x64xf32>
    %9 = tpu.matmul %3, %8, %cst_7 {dimension_numbers = #tpu.dot_dimension_numbers<[1], [0], [0], [1], [0, 0, 1, 1], [], []>} : vector<16x32xf32>, vector<32x64xf32>, vector<16x64xf32> -> vector<16x64xf32>
    %10 = arith.negf %6 : vector<16x64xf32>
    %11 = math.exp %10 : vector<16x64xf32>
    %cst_8 = arith.constant 1.000000e+00 : f32
    %12 = vector.broadcast %cst_8 : f32 to vector<16x64xf32>
    %13 = arith.addf %12, %11 : vector<16x64xf32>
    %14 = arith.divf %12, %13 : vector<16x64xf32>
    %15 = arith.mulf %6, %14 : vector<16x64xf32>
    %16 = arith.mulf %15, %9 : vector<16x64xf32>
    %c0_9 = arith.constant 0 : index
    %c0_10 = arith.constant 0 : index
    %17 = vector.load %arg6[%c0_9, %c0_10] : memref<16x32xf32, #tpu.memory_space<vmem>>, vector<16x32xf32>
    %c0_11 = arith.constant 0 : index
    %c0_12 = arith.constant 0 : index
    %18 = vector.load %arg4[%c0_11, %c0_12] : memref<64x32xf32, #tpu.memory_space<vmem>>, vector<64x32xf32>
    %cst_13 = arith.constant dense<0.000000e+00> : vector<16x32xf32>
    %19 = tpu.matmul %16, %18, %cst_13 {dimension_numbers = #tpu.dot_dimension_numbers<[1], [0], [0], [1], [0, 0, 1, 1], [], []>} : vector<16x64xf32>, vector<64x32xf32>, vector<16x32xf32> -> vector<16x32xf32>
    %20 = arith.addf %17, %19 : vector<16x32xf32>
    %c0_14 = arith.constant 0 : index
    %c0_15 = arith.constant 0 : index
    %21 = vector.load %arg6[%c0_14, %c0_15] : memref<16x32xf32, #tpu.memory_space<vmem>>, vector<16x32xf32>
    tpu.vector_store %arg6[%c0_14, %c0_15], %20 {strides = array<i32>} : memref<16x32xf32, #tpu.memory_space<vmem>>, vector<16x32xf32>,
    %c0_i32_16 = arith.constant 0 : i32
    %22 = arith.cmpi eq, %arg1, %c0_i32_16 : i32
    %23 = arith.extui %22 : i1 to i32
    %c0_i32_17 = arith.constant 0 : i32
    %24 = arith.cmpi ne, %23, %c0_i32_17 : i32
    scf.if %24 {
      %c0_18 = arith.constant 0 : index
      %c0_19 = arith.constant 0 : index
      %25 = vector.load %arg6[%c0_18, %c0_19] : memref<16x32xf32, #tpu.memory_space<vmem>>, vector<16x32xf32>
      %c0_20 = arith.constant 0 : index
      %c0_21 = arith.constant 0 : index
      %26 = vector.load %arg5[%c0_20, %c0_21] : memref<16x32xf32, #tpu.memory_space<vmem>>, vector<16x32xf32>
      tpu.vector_store %arg5[%c0_20, %c0_21], %25 {strides = array<i32>} : memref<16x32xf32, #tpu.memory_space<vmem>>, vector<16x32xf32>,
    } else {
    }
    return
  }
  func.func @transform_0(%arg0: i32, %arg1: i32) -> (i32, i32) {
    %c0_i32 = arith.constant 0 : i32
    %c0_i32_0 = arith.constant 0 : i32
    return %arg0, %c0_i32 : i32, i32
  }
  func.func @transform_1(%arg0: i32, %arg1: i32) -> (i32, i32, i32) {
    %c0_i32 = arith.constant 0 : i32
    %c0_i32_0 = arith.constant 0 : i32
    %c0_i32_1 = arith.constant 0 : i32
    return %c0_i32, %c0_i32_0, %arg1 : i32, i32, i32
  }
  func.func @transform_2(%arg0: i32, %arg1: i32) -> (i32, i32) {
    %c0_i32 = arith.constant 0 : i32
    %c0_i32_0 = arith.constant 0 : i32
    return %arg1, %c0_i32 : i32, i32
  }
  func.func @transform_3(%arg0: i32, %arg1: i32) -> (i32, i32) {
    %c0_i32 = arith.constant 0 : i32
    %c0_i32_0 = arith.constant 0 : i32
    return %arg0, %c0_i32 : i32, i32
  }
}

</mosaic_0001>

<llo_original>
// kernel: tpu_custom_call.1
$region0: #{tpu_custom_call.1}
  #allocation0 [shape = 'u32[]', space=smem, size = 0x4, offset = 0x4, fixed_abs, tag = 'smem constant byte address 0x4 - core index']
  #allocation1 [shape = 'u32[144,128]{1,0:T(1,128)}', space=vmem, size = 0x12000, scoped, tag = 'internal scratch']
  #allocation2 [shape = 'f32[16,32]{1,0:T(8,128)}', space=vmem, size = 0x2000, scoped, tag = 'scratch operand']
  %s0 = inlined_call_operand.vmem [shape: f32[16,32], index: 0, kind: input, shape index: {}]
  %s1 = inlined_call_operand.vmem [shape: f32[2,32,64], index: 1, kind: input, shape index: {}]
  %s2 = inlined_call_operand.vmem [shape: f32[64,32], index: 2, kind: input, shape index: {}]
  %s3 = inlined_call_operand.hbm [shape: f32[16,32], index: 3, kind: output, shape index: {}]
  %s4 = sld [smem:[#allocation0]]
  $region30: #{tpu_custom_call.1} parent=0
    _
  %s6 = ssub.s32 1, %s4
  %s7 = scalar_select 0, %s6, %s4
  $region1: #{tpu_custom_call.1} parent=0
    #allocation3 [shape = 'u8[8192]{0}', space=vmem, size = 0x2000, scoped, tag = 'output window, operand 0, single buffered']
    #allocation4 [shape = 's32[1]{0}', space=sflag, size = 0x4, scoped, tag = 'scoped memory for tpu_custom_call.1']
    %8 = vsyncpa [#allocation4], 0
    // Predicated region
    $region2: #{tpu_custom_call.1} parent=1 // pred_check
      _
    $region3: #{tpu_custom_call.1} parent=1 // pred_check_branch
      %10 = sbr.rel (0) target = $region5
    $region4: #{tpu_custom_call.1} parent=1 // pred_region
      _
    $region5: #{tpu_custom_call.1} parent=1 // pred_fallthru
      _
    // Predicated region
    $region6: #{tpu_custom_call.1} parent=1 // pred_check
      _
    $region7: #{tpu_custom_call.1} parent=1 // pred_check_branch
      %12 = sbr.rel (0) target = $region9
    $region8: #{tpu_custom_call.1} parent=1 // pred_region
      _
    $region9: #{tpu_custom_call.1} parent=1 // pred_fallthru
      _
    // Predicated region
    $region10: #{tpu_custom_call.1} parent=1 // pred_check
      _
    $region11: #{tpu_custom_call.1} parent=1 // pred_check_branch
      %14 = sbr.rel (0) target = $region13
    $region12: #{tpu_custom_call.1} parent=1 // pred_region
      _
    $region13: #{tpu_custom_call.1} parent=1 // pred_fallthru
      _
    %p15 = scmp.eq.s32.totalorder 0, 0
    // Predicated region
    $region14: #{tpu_custom_call.1} parent=1 // pred_check
      %p16 = pneg %p15
    $region15: #{tpu_custom_call.1} parent=1 // pred_check_branch
      %18 = sbr.rel (%p16) target = $region17
    $region16: #{tpu_custom_call.1} parent=1 // pred_region
      %vm19 = vcmask 261120
      %20 = vst.msk [vmem:[#allocation2] sm:$0xff] %vm19, 0.0
      %21 = vst.msk [vmem:[#allocation2 + $0x8] sm:$0xff] %vm19, 0.0
    $region17: #{tpu_custom_call.1} parent=1 // pred_fallthru
      _
    %v22 = vld [vmem:[%s0] sm:$0xff]
    %v23 = vld [vmem:[%s0 + $0x8] sm:$0xff]
    %v24 = vld [vmem:[%s1] sm:$0xff]
    %v25 = vld [vmem:[%s1 + $0x8] sm:$0xff]
    %v26 = vld [vmem:[%s1 + $0x10] sm:$0xff]
    %v27 = vld [vmem:[%s1 + $0x18] sm:$0xff]
    %vm28 = vcmask 261120
    %v30 = vsel %vm28, %v22, 0
    %v33 = vsel %vm28, %v23, 0
    %35 = vmatprep.subr.mxu0 0.0
    %36 = vmatpush1.msra.mxu0 0.0
    %37 = vmatprep.subr.mxu0 0.0
    %38 = vmatpush1.msra.mxu0 0.0
    %39 = vmatprep.subr.mxu0 0.0
    %40 = vmatpush1.msra.mxu0 0.0
    %41 = vmatprep.subr.mxu0 0.0
    %42 = vmatpush1.msra.mxu0 0.0
    %43 = vmatprep.subr.mxu0 0.0
    %44 = vmatpush1.msra.mxu0 0.0
    %45 = vmatprep.subr.mxu0 0.0
    %46 = vmatpush1.msra.mxu0 0.0
    %47 = vmatprep.subr.mxu0 0.0
    %48 = vmatpush1.msra.mxu0 0.0
    %49 = vmatprep.subr.mxu0 0.0
    %50 = vmatpush1.msra.mxu0 0.0
    %51 = vmatprep.subr.mxu0 0.0
    %52 = vmatpush1.msra.mxu0 0.0
    %53 = vmatprep.subr.mxu0 0.0
    %54 = vmatpush1.msra.mxu0 0.0
    %55 = vmatprep.subr.mxu0 0.0
    %56 = vmatpush1.msra.mxu0 0.0
    %57 = vmatprep.subr.mxu0 0.0
    %58 = vmatpush1.msra.mxu0 0.0
    %59 = vmatprep.subr.mxu0 0.0
    %60 = vmatpush1.msra.mxu0 %v27
    %61 = vmatprep.subr.mxu0 0.0
    %62 = vmatpush1.msra.mxu0 %v26
    %63 = vmatprep.subr.mxu0 0.0
    %64 = vmatpush1.msra.mxu0 %v25
    %65 = vmatprep.subr.mxu0 0.0
    %66 = vmatpush1.msra.mxu0 %v24
    %67 = vmatprep.subr.mxu0 0.0
    %68 = vmatpush2.msra.mxu0 0.0
    %69 = vmatprep.subr.mxu0 0.0
    %70 = vmatpush2.msra.mxu0 0.0
    %71 = vmatprep.subr.mxu0 0.0
    %72 = vmatpush2.msra.mxu0 0.0
    %73 = vmatprep.subr.mxu0 0.0
    %74 = vmatpush2.msra.mxu0 0.0
    %75 = vmatprep.subr.mxu0 0.0
    %76 = vmatpush2.msra.mxu0 0.0
    %77 = vmatprep.subr.mxu0 0.0
    %78 = vmatpush2.msra.mxu0 0.0
    %79 = vmatprep.subr.mxu0 0.0
    %80 = vmatpush2.msra.mxu0 0.0
    %81 = vmatprep.subr.mxu0 0.0
    %82 = vmatpush2.msra.mxu0 0.0
    %83 = vmatprep.subr.mxu0 0.0
    %84 = vmatpush2.msra.mxu0 0.0
    %85 = vmatprep.subr.mxu0 0.0
    %86 = vmatpush2.msra.mxu0 0.0
    %87 = vmatprep.subr.mxu0 0.0
    %88 = vmatpush2.msra.mxu0 0.0
    %89 = vmatprep.subr.mxu0 0.0
    %90 = vmatpush2.msra.mxu0 0.0
    %91 = vmatprep.subr.mxu0 0.0
    %92 = vmatpush2.msra.mxu0 0.0
    %93 = vmatprep.subr.mxu0 0.0
    %94 = vmatpush2.msra.mxu0 0.0
    %95 = vmatprep.subr.mxu0 0.0
    %96 = vmatpush2.msra.mxu0 0.0
    %97 = vmatprep.subr.mxu0 0.0
    %98 = vmatpush2.msra.mxu0 0.0
    %99 = vmatprep.mubr.f32.mxu0 0.0
    %100 = vmatmul.mubr.f32.gmra.mxu0 %v30
    %v101 = vpop.f32.mrf.mxu0
    %v102 = vadd.f32 0.0, %v101
    %v103 = vpop.f32.mrf.mxu0
    %104 = vmatprep.mubr.f32.mxu0 0.0
    %105 = vmatmul.mubr.f32.gmra.mxu0 %v33
    %v106 = vpop.f32.mrf.mxu0
    %v107 = vadd.f32 0.0, %v106
    %v108 = vpop.f32.mrf.mxu0
    %109 = vdwg.mxu0
    %s110 = scalar_lea.vmem %s1, 32
    %v111 = vld [vmem:[%s110] sm:$0xff]
    %v112 = vld [vmem:[%s110 + $0x8] sm:$0xff]
    %v113 = vld [vmem:[%s110 + $0x10] sm:$0xff]
    %v114 = vld [vmem:[%s110 + $0x18] sm:$0xff]
    %115 = vmatprep.subr.mxu0 0.0
    %116 = vmatpush1.msra.mxu0 0.0
    %117 = vmatprep.subr.mxu0 0.0
    %118 = vmatpush1.msra.mxu0 0.0
    %119 = vmatprep.subr.mxu0 0.0
    %120 = vmatpush1.msra.mxu0 0.0
    %121 = vmatprep.subr.mxu0 0.0
    %122 = vmatpush1.msra.mxu0 0.0
    %123 = vmatprep.subr.mxu0 0.0
    %124 = vmatpush1.msra.mxu0 0.0
    %125 = vmatprep.subr.mxu0 0.0
    %126 = vmatpush1.msra.mxu0 0.0
    %127 = vmatprep.subr.mxu0 0.0
    %128 = vmatpush1.msra.mxu0 0.0
    %129 = vmatprep.subr.mxu0 0.0
    %130 = vmatpush1.msra.mxu0 0.0
    %131 = vmatprep.subr.mxu0 0.0
    %132 = vmatpush1.msra.mxu0 0.0
    %133 = vmatprep.subr.mxu0 0.0
    %134 = vmatpush1.msra.mxu0 0.0
    %135 = vmatprep.subr.mxu0 0.0
    %136 = vmatpush1.msra.mxu0 0.0
    %137 = vmatprep.subr.mxu0 0.0
    %138 = vmatpush1.msra.mxu0 0.0
    %139 = vmatprep.subr.mxu0 0.0
    %140 = vmatpush1.msra.mxu0 %v114
    %141 = vmatprep.subr.mxu0 0.0
    %142 = vmatpush1.msra.mxu0 %v113
    %143 = vmatprep.subr.mxu0 0.0
    %144 = vmatpush1.msra.mxu0 %v112
    %145 = vmatprep.subr.mxu0 0.0
    %146 = vmatpush1.msra.mxu0 %v111
    %147 = vmatprep.subr.mxu0 0.0
    %148 = vmatpush2.msra.mxu0 0.0
    %149 = vmatprep.subr.mxu0 0.0
    %150 = vmatpush2.msra.mxu0 0.0
    %151 = vmatprep.subr.mxu0 0.0
    %152 = vmatpush2.msra.mxu0 0.0
    %153 = vmatprep.subr.mxu0 0.0
    %154 = vmatpush2.msra.mxu0 0.0
    %155 = vmatprep.subr.mxu0 0.0
    %156 = vmatpush2.msra.mxu0 0.0
    %157 = vmatprep.subr.mxu0 0.0
    %158 = vmatpush2.msra.mxu0 0.0
    %159 = vmatprep.subr.mxu0 0.0
    %160 = vmatpush2.msra.mxu0 0.0
    %161 = vmatprep.subr.mxu0 0.0
    %162 = vmatpush2.msra.mxu0 0.0
    %163 = vmatprep.subr.mxu0 0.0
    %164 = vmatpush2.msra.mxu0 0.0
    %165 = vmatprep.subr.mxu0 0.0
    %166 = vmatpush2.msra.mxu0 0.0
    %167 = vmatprep.subr.mxu0 0.0
    %168 = vmatpush2.msra.mxu0 0.0
    %169 = vmatprep.subr.mxu0 0.0
    %170 = vmatpush2.msra.mxu0 0.0
    %171 = vmatprep.subr.mxu0 0.0
    %172 = vmatpush2.msra.mxu0 0.0
    %173 = vmatprep.subr.mxu0 0.0
    %174 = vmatpush2.msra.mxu0 0.0
    %175 = vmatprep.subr.mxu0 0.0
    %176 = vmatpush2.msra.mxu0 0.0
    %177 = vmatprep.subr.mxu0 0.0
    %178 = vmatpush2.msra.mxu0 0.0
    %179 = vmatprep.mubr.f32.mxu0 0.0
    %180 = vmatmul.mubr.f32.gmra.mxu0 %v30
    %v181 = vpop.f32.mrf.mxu0
    %v182 = vadd.f32 0.0, %v181
    %v183 = vpop.f32.mrf.mxu0
    %184 = vmatprep.mubr.f32.mxu0 0.0
    %185 = vmatmul.mubr.f32.gmra.mxu0 %v33
    %v186 = vpop.f32.mrf.mxu0
    %v187 = vadd.f32 0.0, %v186
    %v188 = vpop.f32.mrf.mxu0
    %189 = vdwg.mxu0
    %v190 = vxor.u32 %v102, 2147483648
    %v191 = vxor.u32 %v107, 2147483648
    %v192 = vmul.f32 %v190, 1.442695
    %v193 = vpow.pop %v192
    %v194 = vmul.f32 %v191, 1.442695
    %v195 = vpow.pop %v194
    %v196 = vadd.f32 %v193, 1.0
    %v197 = vadd.f32 %v195, 1.0
    %v198 = vrcp.pop %v196
    %v199 = vmul.f32 1.0, %v198
    %v200 = vrcp.pop %v197
    %v201 = vmul.f32 1.0, %v200
    %v202 = vmul.f32 %v102, %v199
    %v203 = vmul.f32 %v107, %v201
    %v204 = vmul.f32 %v202, %v182
    %v205 = vmul.f32 %v203, %v187
    %v206 = vld [vmem:[#allocation2] sm:$0xff]
    %v207 = vld [vmem:[#allocation2 + $0x8] sm:$0xff]
    %v208 = vld [vmem:[%s2] sm:$0xff]
    %v209 = vld [vmem:[%s2 + $0x8] sm:$0xff]
    %v210 = vld [vmem:[%s2 + $0x10] sm:$0xff]
    %v211 = vld [vmem:[%s2 + $0x18] sm:$0xff]
    %v212 = vld [vmem:[%s2 + $0x20] sm:$0xff]
    %v213 = vld [vmem:[%s2 + $0x28] sm:$0xff]
    %v214 = vld [vmem:[%s2 + $0x30] sm:$0xff]
    %v215 = vld [vmem:[%s2 + $0x38] sm:$0xff]
    %vm216 = vcmask 523264
    %v218 = vsel %vm216, %v204, 0
    %v221 = vsel %vm216, %v205, 0
    %223 = vmatprep.subr.mxu0 0.0
    %224 = vmatpush1.msra.mxu0 0.0
    %225 = vmatprep.subr.mxu0 0.0
    %226 = vmatpush1.msra.mxu0 0.0
    %227 = vmatprep.subr.mxu0 0.0
    %228 = vmatpush1.msra.mxu0 0.0
    %229 = vmatprep.subr.mxu0 0.0
    %230 = vmatpush1.msra.mxu0 0.0
    %231 = vmatprep.subr.mxu0 0.0
    %232 = vmatpush1.msra.mxu0 0.0
    %233 = vmatprep.subr.mxu0 0.0
    %234 = vmatpush1.msra.mxu0 0.0
    %235 = vmatprep.subr.mxu0 0.0
    %236 = vmatpush1.msra.mxu0 0.0
    %237 = vmatprep.subr.mxu0 0.0
    %238 = vmatpush1.msra.mxu0 0.0
    %239 = vmatprep.subr.mxu0 0.0
    %240 = vmatpush1.msra.mxu0 %v215
    %241 = vmatprep.subr.mxu0 0.0
    %242 = vmatpush1.msra.mxu0 %v214
    %243 = vmatprep.subr.mxu0 0.0
    %244 = vmatpush1.msra.mxu0 %v213
    %245 = vmatprep.subr.mxu0 0.0
    %246 = vmatpush1.msra.mxu0 %v212
    %247 = vmatprep.subr.mxu0 0.0
    %248 = vmatpush1.msra.mxu0 %v211
    %249 = vmatprep.subr.mxu0 0.0
    %250 = vmatpush1.msra.mxu0 %v210
    %251 = vmatprep.subr.mxu0 0.0
    %252 = vmatpush1.msra.mxu0 %v209
    %253 = vmatprep.subr.mxu0 0.0
    %254 = vmatpush1.msra.mxu0 %v208
    %255 = vmatprep.subr.mxu0 0.0
    %256 = vmatpush2.msra.mxu0 0.0
    %257 = vmatprep.subr.mxu0 0.0
    %258 = vmatpush2.msra.mxu0 0.0
    %259 = vmatprep.subr.mxu0 0.0
    %260 = vmatpush2.msra.mxu0 0.0
    %261 = vmatprep.subr.mxu0 0.0
    %262 = vmatpush2.msra.mxu0 0.0
    %263 = vmatprep.subr.mxu0 0.0
    %264 = vmatpush2.msra.mxu0 0.0
    %265 = vmatprep.subr.mxu0 0.0
    %266 = vmatpush2.msra.mxu0 0.0
    %267 = vmatprep.subr.mxu0 0.0
    %268 = vmatpush2.msra.mxu0 0.0
    %269 = vmatprep.subr.mxu0 0.0
    %270 = vmatpush2.msra.mxu0 0.0
    %271 = vmatprep.subr.mxu0 0.0
    %272 = vmatpush2.msra.mxu0 0.0
    %273 = vmatprep.subr.mxu0 0.0
    %274 = vmatpush2.msra.mxu0 0.0
    %275 = vmatprep.subr.mxu0 0.0
    %276 = vmatpush2.msra.mxu0 0.0
    %277 = vmatprep.subr.mxu0 0.0
    %278 = vmatpush2.msra.mxu0 0.0
    %279 = vmatprep.subr.mxu0 0.0
    %280 = vmatpush2.msra.mxu0 0.0
    %281 = vmatprep.subr.mxu0 0.0
    %282 = vmatpush2.msra.mxu0 0.0
    %283 = vmatprep.subr.mxu0 0.0
    %284 = vmatpush2.msra.mxu0 0.0
    %285 = vmatprep.subr.mxu0 0.0
    %286 = vmatpush2.msra.mxu0 0.0
    %287 = vmatprep.mubr.f32.mxu0 0.0
    %288 = vmatmul.mubr.f32.gmra.mxu0 %v218
    %v289 = vpop.f32.mrf.mxu0
    %v290 = vadd.f32 0.0, %v289
    %v291 = vpop.f32.mrf.mxu0
    %292 = vmatprep.mubr.f32.mxu0 0.0
    %293 = vmatmul.mubr.f32.gmra.mxu0 %v221
    %v294 = vpop.f32.mrf.mxu0
    %v295 = vadd.f32 0.0, %v294
    %v296 = vpop.f32.mrf.mxu0
    %297 = vdwg.mxu0
    %v298 = vadd.f32 %v206, %v290
    %v299 = vadd.f32 %v207, %v295
    %300 = vst.msk [vmem:[#allocation2] sm:$0xff] %vm28, %v298
    %301 = vst.msk [vmem:[#allocation2 + $0x8] sm:$0xff] %vm28, %v299
    // Predicated region
    $region18: #{tpu_custom_call.1} parent=1 // pred_check
      %p302 = pneg %p15
    $region19: #{tpu_custom_call.1} parent=1 // pred_check_branch
      %304 = sbr.rel (%p302) target = $region21
    $region20: #{tpu_custom_call.1} parent=1 // pred_region
      %v305 = vld [vmem:[#allocation2] sm:$0xff]
      %v306 = vld [vmem:[#allocation2 + $0x8] sm:$0xff]
      %307 = vst.msk [vmem:[#allocation3] sm:$0xff] %vm28, %v305
      %308 = vst.msk [vmem:[#allocation3 + $0x8] sm:$0xff] %vm28, %v306
    $region21: #{tpu_custom_call.1} parent=1 // pred_fallthru
      _
    // Predicated region
    $region22: #{tpu_custom_call.1} parent=1 // pred_check
      _
    $region23: #{tpu_custom_call.1} parent=1 // pred_check_branch
      %310 = sbr.rel (0) target = $region25
    $region24: #{tpu_custom_call.1} parent=1 // pred_region
      %s312 = ssub.s32 256, 256
      %313 = vsyncadd [#allocation4], %s312
      %s314 = sshll.u32 [#allocation3], 4
      %s315 = int_to_ptr.vmem [resolvable:$true] %s314
      %320 = dma.vmem_to_hbm [thread:$0]  %s315, 256, %s3, [#allocation4], 128, 128, 8
    $region25: #{tpu_custom_call.1} parent=1 // pred_fallthru
      _
    // Predicated region
    $region26: #{tpu_custom_call.1} parent=1 // pred_check
      _
    $region27: #{tpu_custom_call.1} parent=1 // pred_check_branch
      %322 = sbr.rel (0) target = $region29
    $region28: #{tpu_custom_call.1} parent=1 // pred_region
      %323 = dma.done [#allocation4], 256
    $region29: #{tpu_custom_call.1} parent=1 // pred_fallthru
      _
    %324 = vsyncpa [#allocation4], 1

</llo_original>
